<compile_context>
chip_gen: v7x
topology: tpu7x:2x2x1
jax: 0.10.0
libtpu: 0.0.40
codegen_flags: <defaults>
</compile_context>

<pallas_src>
import jax
import jax.numpy as jnp
from jax.experimental import pallas as pl
from jax.experimental.pallas import tpu as pltpu

_LANE = 128            # TPU lane width
_SUBLANE = 8           # TPU sublane count (f32)
_ROW_TILE_MAX = 256    # max batch rows per grid step
_PAD_BIAS = -1e30      # finite "-inf" for padded output classes


def _round_up(n, m):
    return ((n + m - 1) // m) * m


def _fc_multi_kernel(x_ref, w1_ref, b1_ref, w2_ref, b2_ref, w3_ref, b3_ref,
                     o_ref):
    # fc1 + ReLU   (dropout = identity in eval mode)
    h1 = jnp.dot(x_ref[...], w1_ref[...], preferred_element_type=jnp.float32)
    h1 = jnp.maximum(h1 + b1_ref[...], 0.0)

    # fc2 + ReLU   (dropout = identity in eval mode)
    h2 = jnp.dot(h1.astype(w2_ref.dtype), w2_ref[...],
                 preferred_element_type=jnp.float32)
    h2 = jnp.maximum(h2 + b2_ref[...], 0.0)

    # fc3 + log_softmax over the (lane-padded) class axis.
    # Padded classes have bias -1e30 -> exp(shifted) == 0, so they do not
    # perturb the log-sum-exp; the wrapper slices them off.
    logits = jnp.dot(h2.astype(w3_ref.dtype), w3_ref[...],
                     preferred_element_type=jnp.float32)
    logits = logits + b3_ref[...]
    m = jnp.max(logits, axis=-1, keepdims=True)
    shifted = logits - m
    lse = jnp.log(jnp.sum(jnp.exp(shifted), axis=-1, keepdims=True))
    o_ref[...] = (shifted - lse).astype(o_ref.dtype)


def full_connect_multi(x, params, *, use_bf16=False):
    """x: (B, D_in) float32.  params: PyTorch-layout fc{1,2,3} weight/bias.

    Weights arrive as (out, in); transposed here (wrapper glue) so the kernel
    hot path is a straight x @ W MXU chain.  Biases are (1, out) rows.
    """
    w1 = params["w1"].T                      # (D_in, H1)
    w2 = params["w2"].T                      # (H1,  H2)
    w3 = params["w3"].T                      # (H2,  D_out)
    b1 = params["b1"].reshape(1, -1)
    b2 = params["b2"].reshape(1, -1)
    b3 = params["b3"].reshape(1, -1)

    B, d_in = x.shape
    h1_dim = w1.shape[1]
    h2_dim = w2.shape[1]
    d_out = w3.shape[1]

    # ---- lane-dense output: pad the class axis to a multiple of 128 -------
    d_out_p = _round_up(d_out, _LANE)
    if d_out_p != d_out:
        pad = d_out_p - d_out
        w3 = jnp.pad(w3, ((0, 0), (0, pad)))                       # zero cols
        b3 = jnp.pad(b3, ((0, 0), (0, pad)), constant_values=_PAD_BIAS)

    # ---- batch tiling: pad B to a multiple of the row tile -----------------
    tb = min(_ROW_TILE_MAX, _round_up(B, _SUBLANE))
    b_p = _round_up(B, tb)
    if b_p != B:
        x = jnp.pad(x, ((0, b_p - B), (0, 0)))

    if use_bf16:
        # MXU inputs in bf16, f32 accumulation, f32 epilogue (v5e-safe).
        x = x.astype(jnp.bfloat16)
        w1 = w1.astype(jnp.bfloat16)
        w2 = w2.astype(jnp.bfloat16)
        w3 = w3.astype(jnp.bfloat16)

    grid = (b_p // tb,)

    x_spec = pl.BlockSpec((tb, d_in), lambda i: (i, 0))
    const = lambda shape: pl.BlockSpec(shape, lambda i: (0, 0))   # resident
    out_spec = pl.BlockSpec((tb, d_out_p), lambda i: (i, 0))

    cost = pl.CostEstimate(
        flops=2 * b_p * (d_in * h1_dim + h1_dim * h2_dim + h2_dim * d_out_p),
        transcendentals=b_p * (d_out_p + 1),          # exp per class + log/row
        bytes_accessed=int(
            sum(a.size * a.dtype.itemsize
                for a in (x, w1, b1, w2, b2, w3, b3)) + b_p * d_out_p * 4),
    )

    out = pl.pallas_call(
        _fc_multi_kernel,
        out_shape=jax.ShapeDtypeStruct((b_p, d_out_p), jnp.float32),
        grid=grid,
        in_specs=[
            x_spec,
            const(w1.shape), const(b1.shape),
            const(w2.shape), const(b2.shape),
            const(w3.shape), const(b3.shape),
        ],
        out_specs=out_spec,
        compiler_params=pltpu.CompilerParams(
            dimension_semantics=("parallel",),      # batch tiles independent
            vmem_limit_bytes=32 * 1024 * 1024,
        ),
        cost_estimate=cost,
    )(x, w1, b1, w2, b2, w3, b3)

    return out[:B, :d_out]


def init_params(key, layer_dims):
    """Deterministic PyTorch-Linear-style init (uniform(-1/sqrt(fan_in), +))."""
    d0, d1, d2, d3 = layer_dims
    keys = jax.random.split(key, 6)

    def lin(kw, kb, fan_in, fan_out):
        bound = 1.0 / jnp.sqrt(jnp.float32(fan_in))
        w = jax.random.uniform(kw, (fan_out, fan_in), jnp.float32, -bound, bound)
        b = jax.random.uniform(kb, (fan_out,), jnp.float32, -bound, bound)
        return w, b

    w1, b1 = lin(keys[0], keys[1], d0, d1)
    w2, b2 = lin(keys[2], keys[3], d1, d2)
    w3, b3 = lin(keys[4], keys[5], d2, d3)
    return {"w1": w1, "b1": b1, "w2": w2, "b2": b2, "w3": w3, "b3": b3}


def reference_forward(x, p):
    """Pure-JAX reference of the PyTorch forward (eval-mode dropout)."""
    h1 = jnp.maximum(x @ p["w1"].T + p["b1"], 0.0)
    h2 = jnp.maximum(h1 @ p["w2"].T + p["b2"], 0.0)
    logits = h2 @ p["w3"].T + p["b3"]
    return jax.nn.log_softmax(logits, axis=-1)


if __name__ == "__main__":
    layer_dims = [32, 64, 64, 16]   # [in, hidden1, hidden2, out]
    keepnode_prob = 0.9             # dropout p = 0.1 (identity in eval mode)
    batch = 8

    key = jax.random.PRNGKey(0)
    kx, kp = jax.random.split(key)
    x = jax.random.normal(kx, (batch, layer_dims[0]), jnp.float32)
    params = init_params(kp, layer_dims)

    out = full_connect_multi(x, params)          # f32 path: exact vs reference
    out = jax.block_until_ready(out)

    ref = reference_forward(x, params)
    assert out.shape == (batch, layer_dims[-1])
    assert jnp.allclose(out, ref, atol=1e-5, rtol=1e-5), "mismatch vs reference"

    # bf16 MXU path (looser tolerance) — exercises the v6e/v7x-oriented option.
    out_bf16 = jax.block_until_ready(full_connect_multi(x, params, use_bf16=True))
    assert jnp.allclose(out_bf16, ref, atol=5e-2, rtol=5e-2), "bf16 mismatch"

    print("KERNEL_OK")
</pallas_src>

<mosaic_0001>
module attributes {stable_mosaic.version = 11 : i64} {
  func.func @_fc_multi_kernel(%arg0: i32, %arg1: memref<8x32xf32, #tpu.memory_space<vmem>>, %arg2: memref<32x64xf32, #tpu.memory_space<vmem>>, %arg3: memref<1x64xf32, #tpu.memory_space<vmem>>, %arg4: memref<64x64xf32, #tpu.memory_space<vmem>>, %arg5: memref<1x64xf32, #tpu.memory_space<vmem>>, %arg6: memref<64x128xf32, #tpu.memory_space<vmem>>, %arg7: memref<1x128xf32, #tpu.memory_space<vmem>>, %arg8: memref<8x128xf32, #tpu.memory_space<vmem>>) attributes {dimension_semantics = [#tpu.dimension_semantics<parallel>], iteration_bounds = array<i64: 1>, scalar_prefetch = 0 : i64, scratch_operands = 0 : i64, tpu.core_type = #tpu.core_type<tc>, window_params = [{transform_indices = @transform_0, window_bounds = array<i64: 8, 32>}, {pipeline_mode = #tpu.pipeline_mode<synchronous>, transform_indices = @transform_1, window_bounds = array<i64: 32, 64>}, {pipeline_mode = #tpu.pipeline_mode<synchronous>, transform_indices = @transform_2, window_bounds = array<i64: 1, 64>}, {pipeline_mode = #tpu.pipeline_mode<synchronous>, transform_indices = @transform_3, window_bounds = array<i64: 64, 64>}, {pipeline_mode = #tpu.pipeline_mode<synchronous>, transform_indices = @transform_4, window_bounds = array<i64: 1, 64>}, {pipeline_mode = #tpu.pipeline_mode<synchronous>, transform_indices = @transform_5, window_bounds = array<i64: 64, 128>}, {pipeline_mode = #tpu.pipeline_mode<synchronous>, transform_indices = @transform_6, window_bounds = array<i64: 1, 128>}, {transform_indices = @transform_7, window_bounds = array<i64: 8, 128>}]} {
    %c0 = arith.constant 0 : index
    %c0_0 = arith.constant 0 : index
    %0 = vector.load %arg1[%c0, %c0_0] : memref<8x32xf32, #tpu.memory_space<vmem>>, vector<8x32xf32>
    %c0_1 = arith.constant 0 : index
    %c0_2 = arith.constant 0 : index
    %1 = vector.load %arg2[%c0_1, %c0_2] : memref<32x64xf32, #tpu.memory_space<vmem>>, vector<32x64xf32>
    %cst = arith.constant dense<0.000000e+00> : vector<8x64xf32>
    %2 = tpu.matmul %0, %1, %cst {dimension_numbers = #tpu.dot_dimension_numbers<[1], [0], [0], [1], [0, 0, 1, 1], [], []>} : vector<8x32xf32>, vector<32x64xf32>, vector<8x64xf32> -> vector<8x64xf32>
    %c0_3 = arith.constant 0 : index
    %c0_4 = arith.constant 0 : index
    %3 = vector.load %arg3[%c0_3, %c0_4] : memref<1x64xf32, #tpu.memory_space<vmem>>, vector<1x64xf32>
    %4 = vector.broadcast %3 : vector<1x64xf32> to vector<8x64xf32>
    %5 = arith.addf %2, %4 : vector<8x64xf32>
    %cst_5 = arith.constant 0.000000e+00 : f32
    %6 = vector.broadcast %cst_5 : f32 to vector<8x64xf32>
    %7 = arith.maximumf %5, %6 : vector<8x64xf32>
    %c0_6 = arith.constant 0 : index
    %c0_7 = arith.constant 0 : index
    %8 = vector.load %arg4[%c0_6, %c0_7] : memref<64x64xf32, #tpu.memory_space<vmem>>, vector<64x64xf32>
    %cst_8 = arith.constant dense<0.000000e+00> : vector<8x64xf32>
    %9 = tpu.matmul %7, %8, %cst_8 {dimension_numbers = #tpu.dot_dimension_numbers<[1], [0], [0], [1], [0, 0, 1, 1], [], []>} : vector<8x64xf32>, vector<64x64xf32>, vector<8x64xf32> -> vector<8x64xf32>
    %c0_9 = arith.constant 0 : index
    %c0_10 = arith.constant 0 : index
    %10 = vector.load %arg5[%c0_9, %c0_10] : memref<1x64xf32, #tpu.memory_space<vmem>>, vector<1x64xf32>
    %11 = vector.broadcast %10 : vector<1x64xf32> to vector<8x64xf32>
    %12 = arith.addf %9, %11 : vector<8x64xf32>
    %cst_11 = arith.constant 0.000000e+00 : f32
    %13 = vector.broadcast %cst_11 : f32 to vector<8x64xf32>
    %14 = arith.maximumf %12, %13 : vector<8x64xf32>
    %c0_12 = arith.constant 0 : index
    %c0_13 = arith.constant 0 : index
    %15 = vector.load %arg6[%c0_12, %c0_13] : memref<64x128xf32, #tpu.memory_space<vmem>>, vector<64x128xf32>
    %cst_14 = arith.constant dense<0.000000e+00> : vector<8x128xf32>
    %16 = tpu.matmul %14, %15, %cst_14 {dimension_numbers = #tpu.dot_dimension_numbers<[1], [0], [0], [1], [0, 0, 1, 1], [], []>} : vector<8x64xf32>, vector<64x128xf32>, vector<8x128xf32> -> vector<8x128xf32>
    %c0_15 = arith.constant 0 : index
    %c0_16 = arith.constant 0 : index
    %17 = vector.load %arg7[%c0_15, %c0_16] : memref<1x128xf32, #tpu.memory_space<vmem>>, vector<1x128xf32>
    %18 = vector.broadcast %17 : vector<1x128xf32> to vector<8x128xf32>
    %19 = arith.addf %16, %18 : vector<8x128xf32>
    %cst_17 = arith.constant dense<0xFF800000> : vector<8xf32>
    %20 = vector.multi_reduction <maximumf>, %19, %cst_17 [1] : vector<8x128xf32> to vector<8xf32>
    %21 = vector.shape_cast %20 : vector<8xf32> to vector<8x1xf32>
    %22 = vector.broadcast %21 : vector<8x1xf32> to vector<8x128xf32>
    %23 = arith.subf %19, %22 : vector<8x128xf32>
    %24 = math.exp %23 : vector<8x128xf32>
    %cst_18 = arith.constant dense<0.000000e+00> : vector<8xf32>
    %25 = vector.multi_reduction <add>, %24, %cst_18 [1] : vector<8x128xf32> to vector<8xf32>
    %26 = vector.shape_cast %25 : vector<8xf32> to vector<8x1xf32>
    %27 = math.log %26 : vector<8x1xf32>
    %28 = vector.broadcast %27 : vector<8x1xf32> to vector<8x128xf32>
    %29 = arith.subf %23, %28 : vector<8x128xf32>
    %c0_19 = arith.constant 0 : index
    %c0_20 = arith.constant 0 : index
    %30 = vector.load %arg8[%c0_19, %c0_20] : memref<8x128xf32, #tpu.memory_space<vmem>>, vector<8x128xf32>
    tpu.vector_store %arg8[%c0_19, %c0_20], %29 {strides = array<i32>} : memref<8x128xf32, #tpu.memory_space<vmem>>, vector<8x128xf32>,
    return
  }
  func.func @transform_0(%arg0: i32) -> (i32, i32) {
    %c0_i32 = arith.constant 0 : i32
    %c0_i32_0 = arith.constant 0 : i32
    return %arg0, %c0_i32 : i32, i32
  }
  func.func @transform_1(%arg0: i32) -> (i32, i32) {
    %c0_i32 = arith.constant 0 : i32
    %c0_i32_0 = arith.constant 0 : i32
    %c0_i32_1 = arith.constant 0 : i32
    return %c0_i32, %c0_i32_0 : i32, i32
  }
  func.func @transform_2(%arg0: i32) -> (i32, i32) {
    %c0_i32 = arith.constant 0 : i32
    %c0_i32_0 = arith.constant 0 : i32
    %c0_i32_1 = arith.constant 0 : i32
    return %c0_i32, %c0_i32_0 : i32, i32
  }
  func.func @transform_3(%arg0: i32) -> (i32, i32) {
    %c0_i32 = arith.constant 0 : i32
    %c0_i32_0 = arith.constant 0 : i32
    %c0_i32_1 = arith.constant 0 : i32
    return %c0_i32, %c0_i32_0 : i32, i32
  }
  func.func @transform_4(%arg0: i32) -> (i32, i32) {
    %c0_i32 = arith.constant 0 : i32
    %c0_i32_0 = arith.constant 0 : i32
    %c0_i32_1 = arith.constant 0 : i32
    return %c0_i32, %c0_i32_0 : i32, i32
  }
  func.func @transform_5(%arg0: i32) -> (i32, i32) {
    %c0_i32 = arith.constant 0 : i32
    %c0_i32_0 = arith.constant 0 : i32
    %c0_i32_1 = arith.constant 0 : i32
    return %c0_i32, %c0_i32_0 : i32, i32
  }
  func.func @transform_6(%arg0: i32) -> (i32, i32) {
    %c0_i32 = arith.constant 0 : i32
    %c0_i32_0 = arith.constant 0 : i32
    %c0_i32_1 = arith.constant 0 : i32
    return %c0_i32, %c0_i32_0 : i32, i32
  }
  func.func @transform_7(%arg0: i32) -> (i32, i32) {
    %c0_i32 = arith.constant 0 : i32
    %c0_i32_0 = arith.constant 0 : i32
    return %arg0, %c0_i32 : i32, i32
  }
}

</mosaic_0001>

<llo_original>
// kernel: tpu_custom_call.1
$region0: #{tpu_custom_call.1}
  #allocation0 [shape = 'u32[]', space=smem, size = 0x4, offset = 0x4, fixed_abs, tag = 'smem constant byte address 0x4 - core index']
  #allocation1 [shape = 'u32[144,128]{1,0:T(1,128)}', space=vmem, size = 0x12000, scoped, tag = 'internal scratch']
  %s0 = inlined_call_operand.hbm [shape: f32[8,32], index: 0, kind: input, shape index: {}]
  %s1 = inlined_call_operand.hbm [shape: f32[32,64], index: 1, kind: input, shape index: {}]
  %s2 = inlined_call_operand.vmem [shape: f32[1,64], index: 2, kind: input, shape index: {}]
  %s3 = inlined_call_operand.hbm [shape: f32[64,64], index: 3, kind: input, shape index: {}]
  %s4 = inlined_call_operand.vmem [shape: f32[1,64], index: 4, kind: input, shape index: {}]
  %s5 = inlined_call_operand.hbm [shape: f32[64,128], index: 5, kind: input, shape index: {}]
  %s6 = inlined_call_operand.vmem [shape: f32[1,128], index: 6, kind: input, shape index: {}]
  %s7 = inlined_call_operand.hbm [shape: f32[8,128], index: 7, kind: output, shape index: {}]
  %s8 = sld [smem:[#allocation0]]
  $region54: #{tpu_custom_call.1} parent=0
    _
  %s10 = ssub.s32 1, %s8
  %s11 = scalar_select 0, %s10, %s8
  $region1: #{tpu_custom_call.1} parent=0
    #allocation2 [shape = 'u8[4096]{0}', space=vmem, size = 0x1000, scoped, tag = 'input window, operand 0, single buffered']
    #allocation3 [shape = 's32[1]{0}', space=sflag, size = 0x4, scoped, tag = 'scoped memory for tpu_custom_call.1']
    #allocation4 [shape = 's32[1]{0}', space=sflag, size = 0x4, scoped, tag = 'scoped memory for tpu_custom_call.1']
    #allocation5 [shape = 'u8[16384]{0}', space=vmem, size = 0x4000, scoped, tag = 'input window, operand 1, single buffered']
    #allocation6 [shape = 's32[1]{0}', space=sflag, size = 0x4, scoped, tag = 'scoped memory for tpu_custom_call.1']
    #allocation7 [shape = 'u8[32768]{0}', space=vmem, size = 0x8000, scoped, tag = 'input window, operand 3, single buffered']
    #allocation8 [shape = 'u8[32768]{0}', space=vmem, size = 0x8000, scoped, tag = 'input window, operand 5, single buffered']
    #allocation9 [shape = 's32[1]{0}', space=sflag, size = 0x4, scoped, tag = 'scoped memory for tpu_custom_call.1']
    #allocation10 [shape = 'u8[4096]{0}', space=vmem, size = 0x1000, scoped, tag = 'output window, operand 0, single buffered']
    %12 = vsyncpa [#allocation3], 0
    %13 = vsyncpa [#allocation6], 0
    %14 = vsyncpa [#allocation9], 0
    %15 = vsyncpa [#allocation4], 0
    // Predicated region
    $region2: #{tpu_custom_call.1} parent=1 // pred_check
      _
    $region3: #{tpu_custom_call.1} parent=1 // pred_check_branch
      %17 = sbr.rel (0) target = $region5
    $region4: #{tpu_custom_call.1} parent=1 // pred_region
      %s19 = ssub.s32 128, 128
      %20 = vsyncadd [#allocation3], %s19
      %s22 = sshll.u32 [#allocation2], 4
      %s23 = int_to_ptr.vmem [resolvable:$true] %s22
      %25 = dma.hbm_to_vmem [thread:$0]  %s0, 128, %s23, [#allocation3]
    $region5: #{tpu_custom_call.1} parent=1 // pred_fallthru
      _
    // Predicated region
    $region6: #{tpu_custom_call.1} parent=1 // pred_check
      _
    $region7: #{tpu_custom_call.1} parent=1 // pred_check_branch
      %27 = sbr.rel (0) target = $region9
    $region8: #{tpu_custom_call.1} parent=1 // pred_region
      %s29 = ssub.s32 512, 512
      %30 = vsyncadd [#allocation6], %s29
      %s31 = sshll.u32 [#allocation5], 4
      %s32 = int_to_ptr.vmem [resolvable:$true] %s31
      %37 = dma.hbm_to_vmem [thread:$0]  %s1, 512, %s32, [#allocation6], 128, 128, 8
    $region9: #{tpu_custom_call.1} parent=1 // pred_fallthru
      _
    // Predicated region
    $region10: #{tpu_custom_call.1} parent=1 // pred_check
      _
    $region11: #{tpu_custom_call.1} parent=1 // pred_check_branch
      %39 = sbr.rel (0) target = $region13
    $region12: #{tpu_custom_call.1} parent=1 // pred_region
      _
    $region13: #{tpu_custom_call.1} parent=1 // pred_fallthru
      _
    // Predicated region
    $region14: #{tpu_custom_call.1} parent=1 // pred_check
      _
    $region15: #{tpu_custom_call.1} parent=1 // pred_check_branch
      %41 = sbr.rel (0) target = $region17
    $region16: #{tpu_custom_call.1} parent=1 // pred_region
      %s43 = ssub.s32 1024, 1024
      %44 = vsyncadd [#allocation6], %s43
      %s45 = sshll.u32 [#allocation7], 4
      %s46 = int_to_ptr.vmem [resolvable:$true] %s45
      %51 = dma.hbm_to_vmem [thread:$0]  %s3, 1024, %s46, [#allocation6], 128, 128, 8
    $region17: #{tpu_custom_call.1} parent=1 // pred_fallthru
      _
    // Predicated region
    $region18: #{tpu_custom_call.1} parent=1 // pred_check
      _
    $region19: #{tpu_custom_call.1} parent=1 // pred_check_branch
      %53 = sbr.rel (0) target = $region21
    $region20: #{tpu_custom_call.1} parent=1 // pred_region
      _
    $region21: #{tpu_custom_call.1} parent=1 // pred_fallthru
      _
    // Predicated region
    $region22: #{tpu_custom_call.1} parent=1 // pred_check
      _
    $region23: #{tpu_custom_call.1} parent=1 // pred_check_branch
      %55 = sbr.rel (0) target = $region25
    $region24: #{tpu_custom_call.1} parent=1 // pred_region
      %s57 = ssub.s32 1024, 1024
      %58 = vsyncadd [#allocation9], %s57
      %s59 = sshll.u32 [#allocation8], 4
      %s60 = int_to_ptr.vmem [resolvable:$true] %s59
      %65 = dma.hbm_to_vmem [thread:$0]  %s5, 1024, %s60, [#allocation9], 128, 128, 8
    $region25: #{tpu_custom_call.1} parent=1 // pred_fallthru
      _
    // Predicated region
    $region26: #{tpu_custom_call.1} parent=1 // pred_check
      _
    $region27: #{tpu_custom_call.1} parent=1 // pred_check_branch
      %67 = sbr.rel (0) target = $region29
    $region28: #{tpu_custom_call.1} parent=1 // pred_region
      _
    $region29: #{tpu_custom_call.1} parent=1 // pred_fallthru
      _
    // Predicated region
    $region30: #{tpu_custom_call.1} parent=1 // pred_check
      _
    $region31: #{tpu_custom_call.1} parent=1 // pred_check_branch
      %69 = sbr.rel (0) target = $region33
    $region32: #{tpu_custom_call.1} parent=1 // pred_region
      %70 = dma.done [#allocation3], 128
    $region33: #{tpu_custom_call.1} parent=1 // pred_fallthru
      _
    // Predicated region
    $region34: #{tpu_custom_call.1} parent=1 // pred_check
      _
    $region35: #{tpu_custom_call.1} parent=1 // pred_check_branch
      %72 = sbr.rel (0) target = $region37
    $region36: #{tpu_custom_call.1} parent=1 // pred_region
      %73 = dma.done [#allocation6], 512
    $region37: #{tpu_custom_call.1} parent=1 // pred_fallthru
      _
    // Predicated region
    $region38: #{tpu_custom_call.1} parent=1 // pred_check
      _
    $region39: #{tpu_custom_call.1} parent=1 // pred_check_branch
      %75 = sbr.rel (0) target = $region41
    $region40: #{tpu_custom_call.1} parent=1 // pred_region
      %76 = dma.done [#allocation6], 1024
    $region41: #{tpu_custom_call.1} parent=1 // pred_fallthru
      _
    // Predicated region
    $region42: #{tpu_custom_call.1} parent=1 // pred_check
      _
    $region43: #{tpu_custom_call.1} parent=1 // pred_check_branch
      %78 = sbr.rel (0) target = $region45
    $region44: #{tpu_custom_call.1} parent=1 // pred_region
      %79 = dma.done [#allocation9], 1024
    $region45: #{tpu_custom_call.1} parent=1 // pred_fallthru
      _
    %v80 = vld [vmem:[#allocation2] sm:$0xff]
    %v81 = vld [vmem:[#allocation5] sm:$0xff]
    %v82 = vld [vmem:[#allocation5 + $0x8] sm:$0xff]
    %v83 = vld [vmem:[#allocation5 + $0x10] sm:$0xff]
    %v84 = vld [vmem:[#allocation5 + $0x18] sm:$0xff]
    %v85 = vld [vmem:[%s2] sm:$0x1]
    %v87 = vlaneseq
    %v88 = vshrl.u32 %v87, 7
    %v89 = vsub.s32 0, %v88
    %v90 = vrot.slane %v85, %v89
    %vm92 = vcmask 261120
    %v94 = vsel %vm92, %v80, 0
    %96 = vmatprep.subr.mxu0 0.0
    %97 = vmatpush1.msra.mxu0 %v81
    %98 = vmatprep.subr.mxu0 0.0
    %99 = vmatpush1.msra.mxu0 %v82
    %100 = vmatprep.subr.mxu0 0.0
    %101 = vmatpush1.msra.mxu0 %v83
    %102 = vmatprep.subr.mxu0 0.0
    %103 = vmatpush1.msra.mxu0 %v84
    %104 = vmatprep.subr.mxu0 0.0
    %105 = vmatpush1.msra.mxu0 0.0
    %106 = vmatprep.subr.mxu0 0.0
    %107 = vmatpush1.msra.mxu0 0.0
    %108 = vmatprep.subr.mxu0 0.0
    %109 = vmatpush1.msra.mxu0 0.0
    %110 = vmatprep.subr.mxu0 0.0
    %111 = vmatpush1.msra.mxu0 0.0
    %112 = vmatprep.subr.mxu0 0.0
    %113 = vmatpush1.msra.mxu0 0.0
    %114 = vmatprep.subr.mxu0 0.0
    %115 = vmatpush1.msra.mxu0 0.0
    %116 = vmatprep.subr.mxu0 0.0
    %117 = vmatpush1.msra.mxu0 0.0
    %118 = vmatprep.subr.mxu0 0.0
    %119 = vmatpush1.msra.mxu0 0.0
    %120 = vmatprep.subr.mxu0 0.0
    %121 = vmatpush1.msra.mxu0 0.0
    %122 = vmatprep.subr.mxu0 0.0
    %123 = vmatpush1.msra.mxu0 0.0
    %124 = vmatprep.subr.mxu0 0.0
    %125 = vmatpush1.msra.mxu0 0.0
    %126 = vmatprep.subr.mxu0 0.0
    %127 = vmatpush1.msra.mxu0 0.0
    %128 = vmatprep.subr.mxu0 0.0
    %129 = vmatpush1.msra.mxu0 0.0
    %130 = vmatprep.subr.mxu0 0.0
    %131 = vmatpush1.msra.mxu0 0.0
    %132 = vmatprep.subr.mxu0 0.0
    %133 = vmatpush1.msra.mxu0 0.0
    %134 = vmatprep.subr.mxu0 0.0
    %135 = vmatpush1.msra.mxu0 0.0
    %136 = vmatprep.subr.mxu0 0.0
    %137 = vmatpush1.msra.mxu0 0.0
    %138 = vmatprep.subr.mxu0 0.0
    %139 = vmatpush1.msra.mxu0 0.0
    %140 = vmatprep.subr.mxu0 0.0
    %141 = vmatpush1.msra.mxu0 0.0
    %142 = vmatprep.subr.mxu0 0.0
    %143 = vmatpush1.msra.mxu0 0.0
    %144 = vmatprep.subr.mxu0 0.0
    %145 = vmatpush1.msra.mxu0 0.0
    %146 = vmatprep.subr.mxu0 0.0
    %147 = vmatpush1.msra.mxu0 0.0
    %148 = vmatprep.subr.mxu0 0.0
    %149 = vmatpush1.msra.mxu0 0.0
    %150 = vmatprep.subr.mxu0 0.0
    %151 = vmatpush1.msra.mxu0 0.0
    %152 = vmatprep.subr.mxu0 0.0
    %153 = vmatpush1.msra.mxu0 0.0
    %154 = vmatprep.subr.mxu0 0.0
    %155 = vmatpush1.msra.mxu0 0.0
    %156 = vmatprep.subr.mxu0 0.0
    %157 = vmatpush1.msra.mxu0 0.0
    %158 = vmatprep.subr.mxu0 0.0
    %159 = vmatpush1.msra.mxu0 0.0
    %160 = vmatprep.mubr.f32.mxu0 0.0
    %161 = vmatmul.mubr.f32.gmra.mrb[0].mxu0 %v94
    %v162 = vpop.f32.mrb[0].mxu0
    %v163 = vadd.f32 %v90, %v162
    %v164 = vpop.f32.mrb[0].mxu0
    %165 = vdwg.mxu0
    %v166 = vmax.f32 %v163, 0.0
    %v167 = vld [vmem:[#allocation7] sm:$0xff]
    %v168 = vld [vmem:[#allocation7 + $0x8] sm:$0xff]
    %v169 = vld [vmem:[#allocation7 + $0x10] sm:$0xff]
    %v170 = vld [vmem:[#allocation7 + $0x18] sm:$0xff]
    %v171 = vld [vmem:[#allocation7 + $0x20] sm:$0xff]
    %v172 = vld [vmem:[#allocation7 + $0x28] sm:$0xff]
    %v173 = vld [vmem:[#allocation7 + $0x30] sm:$0xff]
    %v174 = vld [vmem:[#allocation7 + $0x38] sm:$0xff]
    %v175 = vld [vmem:[%s4] sm:$0x1]
    %v177 = vlaneseq
    %v178 = vshrl.u32 %v177, 7
    %v179 = vsub.s32 0, %v178
    %v180 = vrot.slane %v175, %v179
    %vm182 = vcmask 523264
    %v184 = vsel %vm182, %v166, 0
    %186 = vmatprep.subr.mxu0 0.0
    %187 = vmatpush1.msra.mxu0 %v167
    %188 = vmatprep.subr.mxu0 0.0
    %189 = vmatpush1.msra.mxu0 %v168
    %190 = vmatprep.subr.mxu0 0.0
    %191 = vmatpush1.msra.mxu0 %v169
    %192 = vmatprep.subr.mxu0 0.0
    %193 = vmatpush1.msra.mxu0 %v170
    %194 = vmatprep.subr.mxu0 0.0
    %195 = vmatpush1.msra.mxu0 %v171
    %196 = vmatprep.subr.mxu0 0.0
    %197 = vmatpush1.msra.mxu0 %v172
    %198 = vmatprep.subr.mxu0 0.0
    %199 = vmatpush1.msra.mxu0 %v173
    %200 = vmatprep.subr.mxu0 0.0
    %201 = vmatpush1.msra.mxu0 %v174
    %202 = vmatprep.subr.mxu0 0.0
    %203 = vmatpush1.msra.mxu0 0.0
    %204 = vmatprep.subr.mxu0 0.0
    %205 = vmatpush1.msra.mxu0 0.0
    %206 = vmatprep.subr.mxu0 0.0
    %207 = vmatpush1.msra.mxu0 0.0
    %208 = vmatprep.subr.mxu0 0.0
    %209 = vmatpush1.msra.mxu0 0.0
    %210 = vmatprep.subr.mxu0 0.0
    %211 = vmatpush1.msra.mxu0 0.0
    %212 = vmatprep.subr.mxu0 0.0
    %213 = vmatpush1.msra.mxu0 0.0
    %214 = vmatprep.subr.mxu0 0.0
    %215 = vmatpush1.msra.mxu0 0.0
    %216 = vmatprep.subr.mxu0 0.0
    %217 = vmatpush1.msra.mxu0 0.0
    %218 = vmatprep.subr.mxu0 0.0
    %219 = vmatpush1.msra.mxu0 0.0
    %220 = vmatprep.subr.mxu0 0.0
    %221 = vmatpush1.msra.mxu0 0.0
    %222 = vmatprep.subr.mxu0 0.0
    %223 = vmatpush1.msra.mxu0 0.0
    %224 = vmatprep.subr.mxu0 0.0
    %225 = vmatpush1.msra.mxu0 0.0
    %226 = vmatprep.subr.mxu0 0.0
    %227 = vmatpush1.msra.mxu0 0.0
    %228 = vmatprep.subr.mxu0 0.0
    %229 = vmatpush1.msra.mxu0 0.0
    %230 = vmatprep.subr.mxu0 0.0
    %231 = vmatpush1.msra.mxu0 0.0
    %232 = vmatprep.subr.mxu0 0.0
    %233 = vmatpush1.msra.mxu0 0.0
    %234 = vmatprep.subr.mxu0 0.0
    %235 = vmatpush1.msra.mxu0 0.0
    %236 = vmatprep.subr.mxu0 0.0
    %237 = vmatpush1.msra.mxu0 0.0
    %238 = vmatprep.subr.mxu0 0.0
    %239 = vmatpush1.msra.mxu0 0.0
    %240 = vmatprep.subr.mxu0 0.0
    %241 = vmatpush1.msra.mxu0 0.0
    %242 = vmatprep.subr.mxu0 0.0
    %243 = vmatpush1.msra.mxu0 0.0
    %244 = vmatprep.subr.mxu0 0.0
    %245 = vmatpush1.msra.mxu0 0.0
    %246 = vmatprep.subr.mxu0 0.0
    %247 = vmatpush1.msra.mxu0 0.0
    %248 = vmatprep.subr.mxu0 0.0
    %249 = vmatpush1.msra.mxu0 0.0
    %250 = vmatprep.mubr.f32.mxu0 0.0
    %251 = vmatmul.mubr.f32.gmra.mrb[0].mxu0 %v184
    %v252 = vpop.f32.mrb[0].mxu0
    %v253 = vadd.f32 %v180, %v252
    %v254 = vpop.f32.mrb[0].mxu0
    %255 = vdwg.mxu0
    %v256 = vmax.f32 %v253, 0.0
    %v257 = vld [vmem:[#allocation8] sm:$0xff]
    %v258 = vld [vmem:[#allocation8 + $0x8] sm:$0xff]
    %v259 = vld [vmem:[#allocation8 + $0x10] sm:$0xff]
    %v260 = vld [vmem:[#allocation8 + $0x18] sm:$0xff]
    %v261 = vld [vmem:[#allocation8 + $0x20] sm:$0xff]
    %v262 = vld [vmem:[#allocation8 + $0x28] sm:$0xff]
    %v263 = vld [vmem:[#allocation8 + $0x30] sm:$0xff]
    %v264 = vld [vmem:[#allocation8 + $0x38] sm:$0xff]
    %v265 = vld [vmem:[%s6] sm:$0x1]
    %v267 = vlaneseq
    %v268 = vshrl.u32 %v267, 7
    %v269 = vsub.s32 0, %v268
    %v270 = vrot.slane %v265, %v269
    %v273 = vsel %vm182, %v256, 0
    %275 = vmatprep.subr.mxu0 0.0
    %276 = vmatpush1.msra.mxu0 %v257
    %277 = vmatprep.subr.mxu0 0.0
    %278 = vmatpush1.msra.mxu0 %v258
    %279 = vmatprep.subr.mxu0 0.0
    %280 = vmatpush1.msra.mxu0 %v259
    %281 = vmatprep.subr.mxu0 0.0
    %282 = vmatpush1.msra.mxu0 %v260
    %283 = vmatprep.subr.mxu0 0.0
    %284 = vmatpush1.msra.mxu0 %v261
    %285 = vmatprep.subr.mxu0 0.0
    %286 = vmatpush1.msra.mxu0 %v262
    %287 = vmatprep.subr.mxu0 0.0
    %288 = vmatpush1.msra.mxu0 %v263
    %289 = vmatprep.subr.mxu0 0.0
    %290 = vmatpush1.msra.mxu0 %v264
    %291 = vmatprep.subr.mxu0 0.0
    %292 = vmatpush1.msra.mxu0 0.0
    %293 = vmatprep.subr.mxu0 0.0
    %294 = vmatpush1.msra.mxu0 0.0
    %295 = vmatprep.subr.mxu0 0.0
    %296 = vmatpush1.msra.mxu0 0.0
    %297 = vmatprep.subr.mxu0 0.0
    %298 = vmatpush1.msra.mxu0 0.0
    %299 = vmatprep.subr.mxu0 0.0
    %300 = vmatpush1.msra.mxu0 0.0
    %301 = vmatprep.subr.mxu0 0.0
    %302 = vmatpush1.msra.mxu0 0.0
    %303 = vmatprep.subr.mxu0 0.0
    %304 = vmatpush1.msra.mxu0 0.0
    %305 = vmatprep.subr.mxu0 0.0
    %306 = vmatpush1.msra.mxu0 0.0
    %307 = vmatprep.subr.mxu0 0.0
    %308 = vmatpush1.msra.mxu0 0.0
    %309 = vmatprep.subr.mxu0 0.0
    %310 = vmatpush1.msra.mxu0 0.0
    %311 = vmatprep.subr.mxu0 0.0
    %312 = vmatpush1.msra.mxu0 0.0
    %313 = vmatprep.subr.mxu0 0.0
    %314 = vmatpush1.msra.mxu0 0.0
    %315 = vmatprep.subr.mxu0 0.0
    %316 = vmatpush1.msra.mxu0 0.0
    %317 = vmatprep.subr.mxu0 0.0
    %318 = vmatpush1.msra.mxu0 0.0
    %319 = vmatprep.subr.mxu0 0.0
    %320 = vmatpush1.msra.mxu0 0.0
    %321 = vmatprep.subr.mxu0 0.0
    %322 = vmatpush1.msra.mxu0 0.0
    %323 = vmatprep.subr.mxu0 0.0
    %324 = vmatpush1.msra.mxu0 0.0
    %325 = vmatprep.subr.mxu0 0.0
    %326 = vmatpush1.msra.mxu0 0.0
    %327 = vmatprep.subr.mxu0 0.0
    %328 = vmatpush1.msra.mxu0 0.0
    %329 = vmatprep.subr.mxu0 0.0
    %330 = vmatpush1.msra.mxu0 0.0
    %331 = vmatprep.subr.mxu0 0.0
    %332 = vmatpush1.msra.mxu0 0.0
    %333 = vmatprep.subr.mxu0 0.0
    %334 = vmatpush1.msra.mxu0 0.0
    %335 = vmatprep.subr.mxu0 0.0
    %336 = vmatpush1.msra.mxu0 0.0
    %337 = vmatprep.subr.mxu0 0.0
    %338 = vmatpush1.msra.mxu0 0.0
    %339 = vmatprep.mubr.f32.mxu0 0.0
    %340 = vmatmul.mubr.f32.gmra.mrb[0].mxu0 %v273
    %v341 = vpop.f32.mrb[0].mxu0
    %v342 = vadd.f32 %v270, %v341
    %v343 = vpop.f32.mrb[0].mxu0
    %344 = vdwg.mxu0
    %345 = vmax.xlane.f32.xlu0 %v342
    %v346 = vpop.xlane.xlu0 %345
    %v347 = vsub.f32 %v342, %v346
    %v348 = vmul.f32 %v347, 1.442695
    %v349 = vpow.pop %v348
    %350 = vadd.xlane.f32.xlu0 %v349
    %v351 = vpop.xlane.xlu0 %350
    %v352 = vlog2.pop %v351
    %v353 = vmul.f32 %v352, 0.6931472
    %v354 = vsub.f32 %v347, %v353
    %355 = vst [vmem:[#allocation10] sm:$0xff] %v354
    // Predicated region
    $region46: #{tpu_custom_call.1} parent=1 // pred_check
      _
    $region47: #{tpu_custom_call.1} parent=1 // pred_check_branch
      %357 = sbr.rel (0) target = $region49
    $region48: #{tpu_custom_call.1} parent=1 // pred_region
      %s359 = ssub.s32 128, 128
      %360 = vsyncadd [#allocation4], %s359
      %s362 = sshll.u32 [#allocation10], 4
      %s363 = int_to_ptr.vmem [resolvable:$true] %s362
      %365 = dma.vmem_to_hbm [thread:$0]  %s363, 128, %s7, [#allocation4]
    $region49: #{tpu_custom_call.1} parent=1 // pred_fallthru
      _
    // Predicated region
    $region50: #{tpu_custom_call.1} parent=1 // pred_check
      _
    $region51: #{tpu_custom_call.1} parent=1 // pred_check_branch
      %367 = sbr.rel (0) target = $region53
    $region52: #{tpu_custom_call.1} parent=1 // pred_region
      %368 = dma.done [#allocation4], 128
    $region53: #{tpu_custom_call.1} parent=1 // pred_fallthru
      _
    %369 = vsyncpa [#allocation3], 1
    %370 = vsyncpa [#allocation6], 1
    %371 = vsyncpa [#allocation9], 1
    %372 = vsyncpa [#allocation4], 1

</llo_original>
